<compile_context>
chip_gen: v7x
topology: tpu7x:2x2x1
jax: 0.10.0
libtpu: 0.0.40
codegen_flags: <defaults>
</compile_context>

<pallas_src>
import functools

import jax
import jax.numpy as jnp
from jax.experimental import pallas as pl
from jax.experimental.pallas import tpu as pltpu

_LANE = 128


def _dot_t(w, x):
    """w: [M, K] @ x: [K, N] -> [M, N] with f32 accumulation.

    For tiny contraction dims an MXU pass is almost all padding and only adds
    result-FIFO latency to a 3-deep dependent chain, so unroll to VPU
    broadcast-FMAs instead; larger K goes to the MXU.
    """
    k = w.shape[1]
    if k <= 4:
        acc = w[:, 0:1] * x[0:1, :]
        for i in range(1, k):
            acc = acc + w[:, i:i + 1] * x[i:i + 1, :]
        return acc
    return jnp.dot(w, x, preferred_element_type=jnp.float32)


def _mlp_kernel(xT_ref, w1_ref, b1_ref, w2_ref, b2_ref, w3_ref, b3_ref, oT_ref):
    xT = xT_ref[...]                                                  # [in_f, blk]
    h1 = jnp.maximum(_dot_t(w1_ref[...], xT) + b1_ref[...], 0.0)      # [h, blk]
    h2 = jnp.maximum(_dot_t(w2_ref[...], h1) + b2_ref[...], 0.0)      # [h, blk]
    out = _dot_t(w3_ref[...], h2) + b3_ref[...]                       # [out_f, blk]
    oT_ref[...] = out.astype(oT_ref.dtype)


@functools.partial(jax.jit, static_argnames=("block_n",))
def blob_model_forward(x, params, *, block_n=1024):
    """Forward pass of BlobModel (raw logits, like the PyTorch module).

    x:      [N, input_features] float32
    params: dict with PyTorch-layout weights:
              w1 [h, in], b1 [h, 1], w2 [h, h], b2 [h, 1], w3 [out, h], b3 [out, 1]
    """
    n, in_f = x.shape
    h = params["w1"].shape[0]
    out_f = params["w3"].shape[0]

    # Lane-aligned batch tile, shrunk so the grid always has >= 2 steps (v7x has
    # two TensorCores; a single-step grid would leave one idle).
    blk = max(_LANE, (block_n // _LANE) * _LANE)
    half = max(_LANE, pl.cdiv(n, 2 * _LANE) * _LANE)
    blk = min(blk, half)
    n_steps = max(2, pl.cdiv(n, blk))
    n_pad = n_steps * blk

    # Put batch on the lane axis and pad it; padded columns are sliced off after.
    xT = jnp.pad(x.T, ((0, 0), (0, n_pad - n)))

    outT = pl.pallas_call(
        _mlp_kernel,
        out_shape=jax.ShapeDtypeStruct((out_f, n_pad), jnp.float32),
        grid_spec=pl.GridSpec(
            grid=(n_steps,),
            in_specs=[
                # activations: tiled along the (lane) batch axis
                pl.BlockSpec((in_f, blk), lambda i: (0, i)),
                # weights / biases: whole arrays, VMEM-resident across the grid
                pl.BlockSpec((h, in_f), lambda i: (0, 0)),
                pl.BlockSpec((h, 1), lambda i: (0, 0)),
                pl.BlockSpec((h, h), lambda i: (0, 0)),
                pl.BlockSpec((h, 1), lambda i: (0, 0)),
                pl.BlockSpec((out_f, h), lambda i: (0, 0)),
                pl.BlockSpec((out_f, 1), lambda i: (0, 0)),
            ],
            out_specs=pl.BlockSpec((out_f, blk), lambda i: (0, i)),
        ),
        compiler_params=pltpu.CompilerParams(
            dimension_semantics=("parallel",),
        ),
    )(xT, params["w1"], params["b1"], params["w2"], params["b2"],
      params["w3"], params["b3"])

    return outT[:, :n].T


def init_blob_model_params(key, input_features, output_features, hidden_units=8):
    """PyTorch nn.Linear-style init: U(-1/sqrt(fan_in), 1/sqrt(fan_in)).
    Weights in PyTorch layout [out_features, in_features]; biases [out, 1]."""
    keys = jax.random.split(key, 6)

    def linear(kw, kb, fan_in, fan_out):
        bound = 1.0 / jnp.sqrt(float(fan_in))
        w = jax.random.uniform(kw, (fan_out, fan_in), jnp.float32, -bound, bound)
        b = jax.random.uniform(kb, (fan_out, 1), jnp.float32, -bound, bound)
        return w, b

    w1, b1 = linear(keys[0], keys[1], input_features, hidden_units)
    w2, b2 = linear(keys[2], keys[3], hidden_units, hidden_units)
    w3, b3 = linear(keys[4], keys[5], hidden_units, output_features)
    return {"w1": w1, "b1": b1, "w2": w2, "b2": b2, "w3": w3, "b3": b3}


def _reference_forward(x, p):
    h1 = jnp.maximum(x @ p["w1"].T + p["b1"].T, 0.0)
    h2 = jnp.maximum(h1 @ p["w2"].T + p["b2"].T, 0.0)
    return h2 @ p["w3"].T + p["b3"].T


if __name__ == "__main__":
    # Small shapes consistent with the blob-classification example:
    # batch=8, input_features=2, output_features=4, hidden_units=8.
    key = jax.random.PRNGKey(0)
    k_params, k_x = jax.random.split(key)

    INPUT_FEATURES = 2
    OUTPUT_FEATURES = 4
    HIDDEN_UNITS = 8
    BATCH = 8  # the wrapper pads / tiles internally, so any batch size works

    params = init_blob_model_params(k_params, INPUT_FEATURES, OUTPUT_FEATURES,
                                    hidden_units=HIDDEN_UNITS)
    x = jax.random.normal(k_x, (BATCH, INPUT_FEATURES), dtype=jnp.float32)

    out = blob_model_forward(x, params)
    out = jax.block_until_ready(out)

    # Sanity check against a plain-JAX reference of the same math.
    ref = _reference_forward(x, params)
    assert out.shape == (BATCH, OUTPUT_FEATURES)
    assert jnp.allclose(out, ref, atol=1e-5, rtol=1e-5)

    print("KERNEL_OK")
</pallas_src>

<mosaic_0001>
module attributes {stable_mosaic.version = 11 : i64} {
  func.func @_mlp_kernel(%arg0: i32, %arg1: memref<2x128xf32, #tpu.memory_space<vmem>>, %arg2: memref<8x2xf32, #tpu.memory_space<vmem>>, %arg3: memref<8x1xf32, #tpu.memory_space<vmem>>, %arg4: memref<8x8xf32, #tpu.memory_space<vmem>>, %arg5: memref<8x1xf32, #tpu.memory_space<vmem>>, %arg6: memref<4x8xf32, #tpu.memory_space<vmem>>, %arg7: memref<4x1xf32, #tpu.memory_space<vmem>>, %arg8: memref<4x128xf32, #tpu.memory_space<vmem>>) attributes {dimension_semantics = [#tpu.dimension_semantics<parallel>], iteration_bounds = array<i64: 2>, scalar_prefetch = 0 : i64, scratch_operands = 0 : i64, tpu.core_type = #tpu.core_type<tc>, window_params = [{transform_indices = @transform_0, window_bounds = array<i64: 2, 128>}, {pipeline_mode = #tpu.pipeline_mode<synchronous>, transform_indices = @transform_1, window_bounds = array<i64: 8, 2>}, {pipeline_mode = #tpu.pipeline_mode<synchronous>, transform_indices = @transform_2, window_bounds = array<i64: 8, 1>}, {pipeline_mode = #tpu.pipeline_mode<synchronous>, transform_indices = @transform_3, window_bounds = array<i64: 8, 8>}, {pipeline_mode = #tpu.pipeline_mode<synchronous>, transform_indices = @transform_4, window_bounds = array<i64: 8, 1>}, {pipeline_mode = #tpu.pipeline_mode<synchronous>, transform_indices = @transform_5, window_bounds = array<i64: 4, 8>}, {pipeline_mode = #tpu.pipeline_mode<synchronous>, transform_indices = @transform_6, window_bounds = array<i64: 4, 1>}, {transform_indices = @transform_7, window_bounds = array<i64: 4, 128>}]} {
    %c0 = arith.constant 0 : index
    %c0_0 = arith.constant 0 : index
    %0 = vector.load %arg1[%c0, %c0_0] : memref<2x128xf32, #tpu.memory_space<vmem>>, vector<2x128xf32>
    %c0_1 = arith.constant 0 : index
    %c0_2 = arith.constant 0 : index
    %1 = vector.load %arg2[%c0_1, %c0_2] : memref<8x2xf32, #tpu.memory_space<vmem>>, vector<8x2xf32>
    %2 = vector.extract_strided_slice %1 {offsets = [0, 0], sizes = [8, 1], strides = [1, 1]} : vector<8x2xf32> to vector<8x1xf32>
    %3 = vector.extract_strided_slice %0 {offsets = [0, 0], sizes = [1, 128], strides = [1, 1]} : vector<2x128xf32> to vector<1x128xf32>
    %4 = vector.broadcast %2 : vector<8x1xf32> to vector<8x128xf32>
    %5 = vector.broadcast %3 : vector<1x128xf32> to vector<8x128xf32>
    %6 = arith.mulf %4, %5 : vector<8x128xf32>
    %7 = vector.extract_strided_slice %1 {offsets = [0, 1], sizes = [8, 1], strides = [1, 1]} : vector<8x2xf32> to vector<8x1xf32>
    %8 = vector.extract_strided_slice %0 {offsets = [1, 0], sizes = [1, 128], strides = [1, 1]} : vector<2x128xf32> to vector<1x128xf32>
    %9 = vector.broadcast %7 : vector<8x1xf32> to vector<8x128xf32>
    %10 = vector.broadcast %8 : vector<1x128xf32> to vector<8x128xf32>
    %11 = arith.mulf %9, %10 : vector<8x128xf32>
    %12 = arith.addf %6, %11 : vector<8x128xf32>
    %c0_3 = arith.constant 0 : index
    %c0_4 = arith.constant 0 : index
    %13 = vector.load %arg3[%c0_3, %c0_4] : memref<8x1xf32, #tpu.memory_space<vmem>>, vector<8x1xf32>
    %14 = vector.broadcast %13 : vector<8x1xf32> to vector<8x128xf32>
    %15 = arith.addf %12, %14 : vector<8x128xf32>
    %cst = arith.constant 0.000000e+00 : f32
    %16 = vector.broadcast %cst : f32 to vector<8x128xf32>
    %17 = arith.maximumf %15, %16 : vector<8x128xf32>
    %c0_5 = arith.constant 0 : index
    %c0_6 = arith.constant 0 : index
    %18 = vector.load %arg4[%c0_5, %c0_6] : memref<8x8xf32, #tpu.memory_space<vmem>>, vector<8x8xf32>
    %cst_7 = arith.constant dense<0.000000e+00> : vector<8x128xf32>
    %19 = tpu.matmul %18, %17, %cst_7 {dimension_numbers = #tpu.dot_dimension_numbers<[1], [0], [0], [1], [0, 0, 1, 1], [], []>} : vector<8x8xf32>, vector<8x128xf32>, vector<8x128xf32> -> vector<8x128xf32>
    %c0_8 = arith.constant 0 : index
    %c0_9 = arith.constant 0 : index
    %20 = vector.load %arg5[%c0_8, %c0_9] : memref<8x1xf32, #tpu.memory_space<vmem>>, vector<8x1xf32>
    %21 = vector.broadcast %20 : vector<8x1xf32> to vector<8x128xf32>
    %22 = arith.addf %19, %21 : vector<8x128xf32>
    %cst_10 = arith.constant 0.000000e+00 : f32
    %23 = vector.broadcast %cst_10 : f32 to vector<8x128xf32>
    %24 = arith.maximumf %22, %23 : vector<8x128xf32>
    %c0_11 = arith.constant 0 : index
    %c0_12 = arith.constant 0 : index
    %25 = vector.load %arg6[%c0_11, %c0_12] : memref<4x8xf32, #tpu.memory_space<vmem>>, vector<4x8xf32>
    %cst_13 = arith.constant dense<0.000000e+00> : vector<4x128xf32>
    %26 = tpu.matmul %25, %24, %cst_13 {dimension_numbers = #tpu.dot_dimension_numbers<[1], [0], [0], [1], [0, 0, 1, 1], [], []>} : vector<4x8xf32>, vector<8x128xf32>, vector<4x128xf32> -> vector<4x128xf32>
    %c0_14 = arith.constant 0 : index
    %c0_15 = arith.constant 0 : index
    %27 = vector.load %arg7[%c0_14, %c0_15] : memref<4x1xf32, #tpu.memory_space<vmem>>, vector<4x1xf32>
    %28 = vector.broadcast %27 : vector<4x1xf32> to vector<4x128xf32>
    %29 = arith.addf %26, %28 : vector<4x128xf32>
    %c0_16 = arith.constant 0 : index
    %c0_17 = arith.constant 0 : index
    %30 = vector.load %arg8[%c0_16, %c0_17] : memref<4x128xf32, #tpu.memory_space<vmem>>, vector<4x128xf32>
    tpu.vector_store %arg8[%c0_16, %c0_17], %29 {strides = array<i32>} : memref<4x128xf32, #tpu.memory_space<vmem>>, vector<4x128xf32>,
    return
  }
  func.func @transform_0(%arg0: i32) -> (i32, i32) {
    %c0_i32 = arith.constant 0 : i32
    %c0_i32_0 = arith.constant 0 : i32
    return %c0_i32, %arg0 : i32, i32
  }
  func.func @transform_1(%arg0: i32) -> (i32, i32) {
    %c0_i32 = arith.constant 0 : i32
    %c0_i32_0 = arith.constant 0 : i32
    %c0_i32_1 = arith.constant 0 : i32
    return %c0_i32, %c0_i32_0 : i32, i32
  }
  func.func @transform_2(%arg0: i32) -> (i32, i32) {
    %c0_i32 = arith.constant 0 : i32
    %c0_i32_0 = arith.constant 0 : i32
    %c0_i32_1 = arith.constant 0 : i32
    return %c0_i32, %c0_i32_0 : i32, i32
  }
  func.func @transform_3(%arg0: i32) -> (i32, i32) {
    %c0_i32 = arith.constant 0 : i32
    %c0_i32_0 = arith.constant 0 : i32
    %c0_i32_1 = arith.constant 0 : i32
    return %c0_i32, %c0_i32_0 : i32, i32
  }
  func.func @transform_4(%arg0: i32) -> (i32, i32) {
    %c0_i32 = arith.constant 0 : i32
    %c0_i32_0 = arith.constant 0 : i32
    %c0_i32_1 = arith.constant 0 : i32
    return %c0_i32, %c0_i32_0 : i32, i32
  }
  func.func @transform_5(%arg0: i32) -> (i32, i32) {
    %c0_i32 = arith.constant 0 : i32
    %c0_i32_0 = arith.constant 0 : i32
    %c0_i32_1 = arith.constant 0 : i32
    return %c0_i32, %c0_i32_0 : i32, i32
  }
  func.func @transform_6(%arg0: i32) -> (i32, i32) {
    %c0_i32 = arith.constant 0 : i32
    %c0_i32_0 = arith.constant 0 : i32
    %c0_i32_1 = arith.constant 0 : i32
    return %c0_i32, %c0_i32_0 : i32, i32
  }
  func.func @transform_7(%arg0: i32) -> (i32, i32) {
    %c0_i32 = arith.constant 0 : i32
    %c0_i32_0 = arith.constant 0 : i32
    return %c0_i32, %arg0 : i32, i32
  }
}

</mosaic_0001>

<llo_original>
// kernel: blob_model_forward.1
$region0: #{blob_model_forward.1}
  #allocation0 [shape = 'u32[]', space=smem, size = 0x4, offset = 0x4, fixed_abs, tag = 'smem constant byte address 0x4 - core index']
  #allocation1 [shape = 'u32[144,128]{1,0:T(1,128)}', space=vmem, size = 0x12000, scoped, tag = 'internal scratch']
  %s0 = inlined_call_operand.vmem [shape: f32[2,256], index: 0, kind: input, shape index: {}]
  %s1 = inlined_call_operand.vmem [shape: f32[8,2], index: 1, kind: input, shape index: {}]
  %s2 = inlined_call_operand.vmem [shape: f32[8,1], index: 2, kind: input, shape index: {}]
  %s3 = inlined_call_operand.vmem [shape: f32[8,8], index: 3, kind: input, shape index: {}]
  %s4 = inlined_call_operand.vmem [shape: f32[8,1], index: 4, kind: input, shape index: {}]
  %s5 = inlined_call_operand.vmem [shape: f32[4,8], index: 5, kind: input, shape index: {}]
  %s6 = inlined_call_operand.vmem [shape: f32[4,1], index: 6, kind: input, shape index: {}]
  %s7 = inlined_call_operand.vmem [shape: f32[4,256], index: 7, kind: output, shape index: {}]
  %s8 = sld [smem:[#allocation0]]
  $region61: #{blob_model_forward.1} parent=0
    _
  %s10 = ssub.s32 1, %s8
  %s11 = scalar_select 0, %s10, %s8
  loop: start=0, step=1, limit=4
  $region2: #{blob_model_forward.1} parent=0 // loop_pre_header
    _
  $region3: #{blob_model_forward.1} parent=0 // loop_header
    %s13 = sphi 0, %s17
    %p14 = scmp.ge.s32.totalorder %s13, 4
    %s23 = sphi 0, %s25
    %s26 = sphi 0, %s23
    %s27 = sphi 0, %s26
    %s43 = sphi 0, %s27
    %s47 = sphi 0, %s47
    %s49 = sphi 0, %s47
    %s50 = sphi 0, %s49
    %s64 = sphi 0, %s50
    %s68 = sphi 0, %s68
    %s70 = sphi 0, %s68
    %s71 = sphi 0, %s70
    %s85 = sphi 0, %s71
    %s89 = sphi 0, %s89
    %s91 = sphi 0, %s89
    %s92 = sphi 0, %s91
    %s106 = sphi 0, %s92
    %s110 = sphi 0, %s110
    %s112 = sphi 0, %s110
    %s113 = sphi 0, %s112
    %s127 = sphi 0, %s113
    %s131 = sphi 0, %s131
    %s133 = sphi 0, %s131
    %s134 = sphi 0, %s133
    %s148 = sphi 0, %s134
    %s152 = sphi 0, %s152
    %s154 = sphi 0, %s152
    %s155 = sphi 0, %s154
    %s169 = sphi 0, %s155
    %s175 = sphi 0, %s177
    %s178 = sphi 0, %s175
    %s179 = sphi 0, %s178
    %s195 = sphi 0, %s179
  $region4: #{blob_model_forward.1} parent=0 // loop_header_branch
    %16 = sbr.rel (%p14) target = $region8
  $region5: #{blob_model_forward.1} parent=0 // loop_body
    %s18 = ssub.s32 %s13, 1
    %s19 = ssub.s32 %s13, 2
    %s20 = sadd.s32 %s13, 1
    %s21 = ssub.s32 %s13, %s20
    %p22 = scmp.eq.s32.totalorder %s21, 0
    %s24 = sadd.s32 %s23, 1
    %s25 = scalar_select %p22, %s23, %s24
    %p28 = pneg %p22
    %p29 = scmp.eq.s32.totalorder %s13, 1
    %p30 = por %p28, %p29
    %p31 = scmp.ne.s32.totalorder %s23, %s26
    %p32 = scmp.eq.s32.totalorder %s13, 0
    %p33 = por %p31, %p32
    %p34 = scmp.ne.s32.totalorder %s23, %s26
    %p35 = scmp.eq.s32.totalorder %s18, 1
    %p36 = por %p34, %p35
    %p37 = scmp.ne.s32.totalorder %s26, %s27
    %p38 = scmp.eq.s32.totalorder %s18, 0
    %p39 = por %p37, %p38
    %p40 = scmp.ne.s32.totalorder %s26, %s27
    %p41 = scmp.eq.s32.totalorder %s19, 1
    %p42 = por %p40, %p41
    %p44 = scmp.ne.s32.totalorder %s27, %s43
    %p45 = scmp.eq.s32.totalorder %s19, 0
    %p46 = por %p44, %p45
    %s48 = sadd.s32 %s47, 1
    %p51 = scmp.eq.s32.totalorder %s13, 1
    %p52 = scmp.ne.s32.totalorder %s47, %s49
    %p53 = scmp.eq.s32.totalorder %s13, 0
    %p54 = por %p52, %p53
    %p55 = scmp.ne.s32.totalorder %s47, %s49
    %p56 = scmp.eq.s32.totalorder %s18, 1
    %p57 = por %p55, %p56
    %p58 = scmp.ne.s32.totalorder %s49, %s50
    %p59 = scmp.eq.s32.totalorder %s18, 0
    %p60 = por %p58, %p59
    %p61 = scmp.ne.s32.totalorder %s49, %s50
    %p62 = scmp.eq.s32.totalorder %s19, 1
    %p63 = por %p61, %p62
    %p65 = scmp.ne.s32.totalorder %s50, %s64
    %p66 = scmp.eq.s32.totalorder %s19, 0
    %p67 = por %p65, %p66
    %s69 = sadd.s32 %s68, 1
    %p72 = scmp.eq.s32.totalorder %s13, 1
    %p73 = scmp.ne.s32.totalorder %s68, %s70
    %p74 = scmp.eq.s32.totalorder %s13, 0
    %p75 = por %p73, %p74
    %p76 = scmp.ne.s32.totalorder %s68, %s70
    %p77 = scmp.eq.s32.totalorder %s18, 1
    %p78 = por %p76, %p77
    %p79 = scmp.ne.s32.totalorder %s70, %s71
    %p80 = scmp.eq.s32.totalorder %s18, 0
    %p81 = por %p79, %p80
    %p82 = scmp.ne.s32.totalorder %s70, %s71
    %p83 = scmp.eq.s32.totalorder %s19, 1
    %p84 = por %p82, %p83
    %p86 = scmp.ne.s32.totalorder %s71, %s85
    %p87 = scmp.eq.s32.totalorder %s19, 0
    %p88 = por %p86, %p87
    %s90 = sadd.s32 %s89, 1
    %p93 = scmp.eq.s32.totalorder %s13, 1
    %p94 = scmp.ne.s32.totalorder %s89, %s91
    %p95 = scmp.eq.s32.totalorder %s13, 0
    %p96 = por %p94, %p95
    %p97 = scmp.ne.s32.totalorder %s89, %s91
    %p98 = scmp.eq.s32.totalorder %s18, 1
    %p99 = por %p97, %p98
    %p100 = scmp.ne.s32.totalorder %s91, %s92
    %p101 = scmp.eq.s32.totalorder %s18, 0
    %p102 = por %p100, %p101
    %p103 = scmp.ne.s32.totalorder %s91, %s92
    %p104 = scmp.eq.s32.totalorder %s19, 1
    %p105 = por %p103, %p104
    %p107 = scmp.ne.s32.totalorder %s92, %s106
    %p108 = scmp.eq.s32.totalorder %s19, 0
    %p109 = por %p107, %p108
    %s111 = sadd.s32 %s110, 1
    %p114 = scmp.eq.s32.totalorder %s13, 1
    %p115 = scmp.ne.s32.totalorder %s110, %s112
    %p116 = scmp.eq.s32.totalorder %s13, 0
    %p117 = por %p115, %p116
    %p118 = scmp.ne.s32.totalorder %s110, %s112
    %p119 = scmp.eq.s32.totalorder %s18, 1
    %p120 = por %p118, %p119
    %p121 = scmp.ne.s32.totalorder %s112, %s113
    %p122 = scmp.eq.s32.totalorder %s18, 0
    %p123 = por %p121, %p122
    %p124 = scmp.ne.s32.totalorder %s112, %s113
    %p125 = scmp.eq.s32.totalorder %s19, 1
    %p126 = por %p124, %p125
    %p128 = scmp.ne.s32.totalorder %s113, %s127
    %p129 = scmp.eq.s32.totalorder %s19, 0
    %p130 = por %p128, %p129
    %s132 = sadd.s32 %s131, 1
    %p135 = scmp.eq.s32.totalorder %s13, 1
    %p136 = scmp.ne.s32.totalorder %s131, %s133
    %p137 = scmp.eq.s32.totalorder %s13, 0
    %p138 = por %p136, %p137
    %p139 = scmp.ne.s32.totalorder %s131, %s133
    %p140 = scmp.eq.s32.totalorder %s18, 1
    %p141 = por %p139, %p140
    %p142 = scmp.ne.s32.totalorder %s133, %s134
    %p143 = scmp.eq.s32.totalorder %s18, 0
    %p144 = por %p142, %p143
    %p145 = scmp.ne.s32.totalorder %s133, %s134
    %p146 = scmp.eq.s32.totalorder %s19, 1
    %p147 = por %p145, %p146
    %p149 = scmp.ne.s32.totalorder %s134, %s148
    %p150 = scmp.eq.s32.totalorder %s19, 0
    %p151 = por %p149, %p150
    %s153 = sadd.s32 %s152, 1
    %p156 = scmp.eq.s32.totalorder %s13, 1
    %p157 = scmp.ne.s32.totalorder %s152, %s154
    %p158 = scmp.eq.s32.totalorder %s13, 0
    %p159 = por %p157, %p158
    %p160 = scmp.ne.s32.totalorder %s152, %s154
    %p161 = scmp.eq.s32.totalorder %s18, 1
    %p162 = por %p160, %p161
    %p163 = scmp.ne.s32.totalorder %s154, %s155
    %p164 = scmp.eq.s32.totalorder %s18, 0
    %p165 = por %p163, %p164
    %p166 = scmp.ne.s32.totalorder %s154, %s155
    %p167 = scmp.eq.s32.totalorder %s19, 1
    %p168 = por %p166, %p167
    %p170 = scmp.ne.s32.totalorder %s155, %s169
    %p171 = scmp.eq.s32.totalorder %s19, 0
    %p172 = por %p170, %p171
    %s173 = ssub.s32 %s13, %s20
    %p174 = scmp.eq.s32.totalorder %s173, 0
    %s176 = sadd.s32 %s175, 1
    %s177 = scalar_select %p174, %s175, %s176
    %p180 = pneg %p174
    %p181 = scmp.eq.s32.totalorder %s13, 1
    %p182 = por %p180, %p181
    %p183 = scmp.ne.s32.totalorder %s175, %s178
    %p184 = scmp.eq.s32.totalorder %s13, 0
    %p185 = por %p183, %p184
    %p186 = scmp.ne.s32.totalorder %s175, %s178
    %p187 = scmp.eq.s32.totalorder %s18, 1
    %p188 = por %p186, %p187
    %p189 = scmp.ne.s32.totalorder %s178, %s179
    %p190 = scmp.eq.s32.totalorder %s18, 0
    %p191 = por %p189, %p190
    %p192 = scmp.ne.s32.totalorder %s178, %s179
    %p193 = scmp.eq.s32.totalorder %s19, 1
    %p194 = por %p192, %p193
    %p196 = scmp.ne.s32.totalorder %s179, %s195
    %p197 = scmp.eq.s32.totalorder %s19, 0
    %p198 = por %p196, %p197
    %p199 = scmp.le.s32.totalorder 1, %s13
    %p200 = scmp.lt.s32.totalorder %s13, 3
    %p201 = pnand %p199, %p200
    %p202 = pneg %p201
    // Predicated region
    $region9: #{blob_model_forward.1} parent=5 // pred_check
      _
    $region10: #{blob_model_forward.1} parent=5 // pred_check_branch
      %204 = sbr.rel (%p201) target = $region12
    $region11: #{blob_model_forward.1} parent=5 // pred_region
      %s205 = ssub.s32 %s13, 1
      // Predicated region
      $region13: #{blob_model_forward.1} parent=11 // pred_check
        %p206 = pneg %p60
      $region14: #{blob_model_forward.1} parent=11 // pred_check_branch
        %208 = sbr.rel (%p206) target = $region16
      $region15: #{blob_model_forward.1} parent=11 // pred_region
        _
      $region16: #{blob_model_forward.1} parent=11 // pred_fallthru
        _
      // Predicated region
      $region17: #{blob_model_forward.1} parent=11 // pred_check
        %p209 = pneg %p81
      $region18: #{blob_model_forward.1} parent=11 // pred_check_branch
        %211 = sbr.rel (%p209) target = $region20
      $region19: #{blob_model_forward.1} parent=11 // pred_region
        _
      $region20: #{blob_model_forward.1} parent=11 // pred_fallthru
        _
      // Predicated region
      $region21: #{blob_model_forward.1} parent=11 // pred_check
        %p212 = pneg %p102
      $region22: #{blob_model_forward.1} parent=11 // pred_check_branch
        %214 = sbr.rel (%p212) target = $region24
      $region23: #{blob_model_forward.1} parent=11 // pred_region
        _
      $region24: #{blob_model_forward.1} parent=11 // pred_fallthru
        _
      // Predicated region
      $region25: #{blob_model_forward.1} parent=11 // pred_check
        %p215 = pneg %p123
      $region26: #{blob_model_forward.1} parent=11 // pred_check_branch
        %217 = sbr.rel (%p215) target = $region28
      $region27: #{blob_model_forward.1} parent=11 // pred_region
        _
      $region28: #{blob_model_forward.1} parent=11 // pred_fallthru
        _
      // Predicated region
      $region29: #{blob_model_forward.1} parent=11 // pred_check
        %p218 = pneg %p144
      $region30: #{blob_model_forward.1} parent=11 // pred_check_branch
        %220 = sbr.rel (%p218) target = $region32
      $region31: #{blob_model_forward.1} parent=11 // pred_region
        _
      $region32: #{blob_model_forward.1} parent=11 // pred_fallthru
        _
      // Predicated region
      $region33: #{blob_model_forward.1} parent=11 // pred_check
        %p221 = pneg %p165
      $region34: #{blob_model_forward.1} parent=11 // pred_check_branch
        %223 = sbr.rel (%p221) target = $region36
      $region35: #{blob_model_forward.1} parent=11 // pred_region
        _
      $region36: #{blob_model_forward.1} parent=11 // pred_fallthru
        _
    $region12: #{blob_model_forward.1} parent=5 // pred_fallthru
      _
    %p224 = scmp.lt.s32.totalorder %s13, 2
    // Predicated region
    $region37: #{blob_model_forward.1} parent=5 // pred_check
      %p225 = pneg %p224
    $region38: #{blob_model_forward.1} parent=5 // pred_check_branch
      %227 = sbr.rel (%p225) target = $region40
    $region39: #{blob_model_forward.1} parent=5 // pred_region
      // Predicated region
      $region41: #{blob_model_forward.1} parent=39 // pred_check
        %p228 = pneg %p33
      $region42: #{blob_model_forward.1} parent=39 // pred_check_branch
        %230 = sbr.rel (%p228) target = $region44
      $region43: #{blob_model_forward.1} parent=39 // pred_region
        %p231 = scmp.lt.s32.totalorder %s13, 1
        %s232 = scalar_select %p231, %s13, 1
        %s233 = smul.addr %s232, 2
        %s234 = scalar_lea.vmem %s0, %s233
      $region44: #{blob_model_forward.1} parent=39 // pred_fallthru
        _
    $region40: #{blob_model_forward.1} parent=5 // pred_fallthru
      _
    %p235 = scmp.le.s32.totalorder 1, %s13
    %p236 = scmp.lt.s32.totalorder %s13, 3
    %p237 = pnand %p235, %p236
    %p238 = pneg %p237
    // Predicated region
    $region45: #{blob_model_forward.1} parent=5 // pred_check
      _
    $region46: #{blob_model_forward.1} parent=5 // pred_check_branch
      %240 = sbr.rel (%p237) target = $region48
    $region47: #{blob_model_forward.1} parent=5 // pred_region
      %s241 = ssub.s32 %s13, 1
      %p242 = scmp.lt.s32.totalorder %s18, 1
      %s243 = scalar_select %p242, %s18, 1
      %s244 = smul.addr %s243, 2
      %s245 = scalar_lea.vmem %s0, %s244
      %p246 = pneg %p39
      %p247 = pneg %p36
      %p248 = pneg %p60
      %p249 = pneg %p57
      %p250 = pneg %p81
      %p251 = pneg %p78
      %p252 = pneg %p102
      %p253 = pneg %p99
      %p254 = pneg %p123
      %p255 = pneg %p120
      %p256 = pneg %p144
      %p257 = pneg %p141
      %p258 = pneg %p165
      %p259 = pneg %p162
      %p260 = pneg %p191
      %p261 = pneg %p188
      %p262 = scmp.lt.s32.totalorder %s18, 1
      %s263 = scalar_select %p262, %s18, 1
      %s264 = smul.addr %s263, 4
      %s265 = scalar_lea.vmem %s7, %s264
      %p266 = scmp.lt.s32.totalorder %s18, 1
      %s267 = scalar_select %p266, %s18, 1
      %s268 = smul.addr %s267, 2
      %s269 = scalar_lea.vmem %s0, %s268
      %p270 = scmp.lt.s32.totalorder %s18, 1
      %s271 = scalar_select %p270, %s18, 1
      %s272 = smul.addr %s271, 4
      %s273 = scalar_lea.vmem %s7, %s272
      %v274 = vld [vmem:[%s269] sm:$0x3]
      %v275 = vld [vmem:[%s1] sm:$0xff]
      %277 = vset.pattern.permute.xlu0 0
      %278 = vperm.xlu0 %277, %v275
      %v279 = vpop.permute.xlu0 %278
      %v281 = vlaneseq
      %v282 = vshrl.u32 %v281, 7
      %v283 = vsub.s32 0, %v282
      %v284 = vrot.slane %v274, %v283
      %v285 = vmul.f32 %v279, %v284
      %286 = vset.pattern.permute.xlu0 1
      %287 = vperm.xlu0 %286, %v275
      %v288 = vpop.permute.xlu0 %287
      %v290 = vlaneseq
      %v291 = vshrl.u32 %v290, 7
      %v292 = vsub.s32 1, %v291
      %v293 = vrot.slane %v274, %v292
      %v294 = vmul.f32 %v288, %v293
      %v295 = vadd.f32 %v285, %v294
      %v296 = vld [vmem:[%s2] sm:$0xff]
      %298 = vset.pattern.permute.xlu0 0
      %299 = vperm.xlu0 %298, %v296
      %v300 = vpop.permute.xlu0 %299
      %v302 = vadd.f32 %v295, %v300
      %v303 = vmax.f32 %v302, 0.0
      %v304 = vld [vmem:[%s3] sm:$0xff]
      %v305 = vld [vmem:[%s4] sm:$0xff]
      %307 = vset.pattern.permute.xlu0 0
      %308 = vperm.xlu0 %307, %v305
      %v309 = vpop.permute.xlu0 %308
      %vm311 = vcmask 64512
      %v313 = vsel %vm311, %v304, 0
      %315 = vmatprep.subr.mxu0 0.0
      %316 = vmatpush1.msra.mxu0 %v303
      %317 = vmatprep.subr.mxu0 0.0
      %318 = vmatpush1.msra.mxu0 0.0
      %319 = vmatprep.subr.mxu0 0.0
      %320 = vmatpush1.msra.mxu0 0.0
      %321 = vmatprep.subr.mxu0 0.0
      %322 = vmatpush1.msra.mxu0 0.0
      %323 = vmatprep.subr.mxu0 0.0
      %324 = vmatpush1.msra.mxu0 0.0
      %325 = vmatprep.subr.mxu0 0.0
      %326 = vmatpush1.msra.mxu0 0.0
      %327 = vmatprep.subr.mxu0 0.0
      %328 = vmatpush1.msra.mxu0 0.0
      %329 = vmatprep.subr.mxu0 0.0
      %330 = vmatpush1.msra.mxu0 0.0
      %331 = vmatprep.subr.mxu0 0.0
      %332 = vmatpush1.msra.mxu0 0.0
      %333 = vmatprep.subr.mxu0 0.0
      %334 = vmatpush1.msra.mxu0 0.0
      %335 = vmatprep.subr.mxu0 0.0
      %336 = vmatpush1.msra.mxu0 0.0
      %337 = vmatprep.subr.mxu0 0.0
      %338 = vmatpush1.msra.mxu0 0.0
      %339 = vmatprep.subr.mxu0 0.0
      %340 = vmatpush1.msra.mxu0 0.0
      %341 = vmatprep.subr.mxu0 0.0
      %342 = vmatpush1.msra.mxu0 0.0
      %343 = vmatprep.subr.mxu0 0.0
      %344 = vmatpush1.msra.mxu0 0.0
      %345 = vmatprep.subr.mxu0 0.0
      %346 = vmatpush1.msra.mxu0 0.0
      %347 = vmatprep.subr.mxu0 0.0
      %348 = vmatpush1.msra.mxu0 0.0
      %349 = vmatprep.subr.mxu0 0.0
      %350 = vmatpush1.msra.mxu0 0.0
      %351 = vmatprep.subr.mxu0 0.0
      %352 = vmatpush1.msra.mxu0 0.0
      %353 = vmatprep.subr.mxu0 0.0
      %354 = vmatpush1.msra.mxu0 0.0
      %355 = vmatprep.subr.mxu0 0.0
      %356 = vmatpush1.msra.mxu0 0.0
      %357 = vmatprep.subr.mxu0 0.0
      %358 = vmatpush1.msra.mxu0 0.0
      %359 = vmatprep.subr.mxu0 0.0
      %360 = vmatpush1.msra.mxu0 0.0
      %361 = vmatprep.subr.mxu0 0.0
      %362 = vmatpush1.msra.mxu0 0.0
      %363 = vmatprep.subr.mxu0 0.0
      %364 = vmatpush1.msra.mxu0 0.0
      %365 = vmatprep.subr.mxu0 0.0
      %366 = vmatpush1.msra.mxu0 0.0
      %367 = vmatprep.subr.mxu0 0.0
      %368 = vmatpush1.msra.mxu0 0.0
      %369 = vmatprep.subr.mxu0 0.0
      %370 = vmatpush1.msra.mxu0 0.0
      %371 = vmatprep.subr.mxu0 0.0
      %372 = vmatpush1.msra.mxu0 0.0
      %373 = vmatprep.subr.mxu0 0.0
      %374 = vmatpush1.msra.mxu0 0.0
      %375 = vmatprep.subr.mxu0 0.0
      %376 = vmatpush1.msra.mxu0 0.0
      %377 = vmatprep.subr.mxu0 0.0
      %378 = vmatpush1.msra.mxu0 0.0
      %379 = vmatprep.mubr.f32.mxu0 0.0
      %380 = vmatmul.mubr.f32.gmra.mrb[0].mxu0 %v313
      %v381 = vpop.f32.mrb[0].mxu0
      %v382 = vadd.f32 %v309, %v381
      %v383 = vpop.f32.mrb[0].mxu0
      %384 = vdwg.mxu0
      %v385 = vmax.f32 %v382, 0.0
      %v386 = vld [vmem:[%s5] sm:$0xf]
      %v387 = vld [vmem:[%s6] sm:$0xf]
      %389 = vset.pattern.permute.xlu0 0
      %390 = vperm.xlu0 %389, %v387
      %v391 = vpop.permute.xlu0 %390
      %v394 = vsel %vm311, %v386, 0
      %396 = vmatprep.subr.mxu0 0.0
      %397 = vmatpush1.msra.mxu0 %v385
      %398 = vmatprep.subr.mxu0 0.0
      %399 = vmatpush1.msra.mxu0 0.0
      %400 = vmatprep.subr.mxu0 0.0
      %401 = vmatpush1.msra.mxu0 0.0
      %402 = vmatprep.subr.mxu0 0.0
      %403 = vmatpush1.msra.mxu0 0.0
      %404 = vmatprep.subr.mxu0 0.0
      %405 = vmatpush1.msra.mxu0 0.0
      %406 = vmatprep.subr.mxu0 0.0
      %407 = vmatpush1.msra.mxu0 0.0
      %408 = vmatprep.subr.mxu0 0.0
      %409 = vmatpush1.msra.mxu0 0.0
      %410 = vmatprep.subr.mxu0 0.0
      %411 = vmatpush1.msra.mxu0 0.0
      %412 = vmatprep.subr.mxu0 0.0
      %413 = vmatpush1.msra.mxu0 0.0
      %414 = vmatprep.subr.mxu0 0.0
      %415 = vmatpush1.msra.mxu0 0.0
      %416 = vmatprep.subr.mxu0 0.0
      %417 = vmatpush1.msra.mxu0 0.0
      %418 = vmatprep.subr.mxu0 0.0
      %419 = vmatpush1.msra.mxu0 0.0
      %420 = vmatprep.subr.mxu0 0.0
      %421 = vmatpush1.msra.mxu0 0.0
      %422 = vmatprep.subr.mxu0 0.0
      %423 = vmatpush1.msra.mxu0 0.0
      %424 = vmatprep.subr.mxu0 0.0
      %425 = vmatpush1.msra.mxu0 0.0
      %426 = vmatprep.subr.mxu0 0.0
      %427 = vmatpush1.msra.mxu0 0.0
      %428 = vmatprep.subr.mxu0 0.0
      %429 = vmatpush1.msra.mxu0 0.0
      %430 = vmatprep.subr.mxu0 0.0
      %431 = vmatpush1.msra.mxu0 0.0
      %432 = vmatprep.subr.mxu0 0.0
      %433 = vmatpush1.msra.mxu0 0.0
      %434 = vmatprep.subr.mxu0 0.0
      %435 = vmatpush1.msra.mxu0 0.0
      %436 = vmatprep.subr.mxu0 0.0
      %437 = vmatpush1.msra.mxu0 0.0
      %438 = vmatprep.subr.mxu0 0.0
      %439 = vmatpush1.msra.mxu0 0.0
      %440 = vmatprep.subr.mxu0 0.0
      %441 = vmatpush1.msra.mxu0 0.0
      %442 = vmatprep.subr.mxu0 0.0
      %443 = vmatpush1.msra.mxu0 0.0
      %444 = vmatprep.subr.mxu0 0.0
      %445 = vmatpush1.msra.mxu0 0.0
      %446 = vmatprep.subr.mxu0 0.0
      %447 = vmatpush1.msra.mxu0 0.0
      %448 = vmatprep.subr.mxu0 0.0
      %449 = vmatpush1.msra.mxu0 0.0
      %450 = vmatprep.subr.mxu0 0.0
      %451 = vmatpush1.msra.mxu0 0.0
      %452 = vmatprep.subr.mxu0 0.0
      %453 = vmatpush1.msra.mxu0 0.0
      %454 = vmatprep.subr.mxu0 0.0
      %455 = vmatpush1.msra.mxu0 0.0
      %456 = vmatprep.subr.mxu0 0.0
      %457 = vmatpush1.msra.mxu0 0.0
      %458 = vmatprep.subr.mxu0 0.0
      %459 = vmatpush1.msra.mxu0 0.0
      %460 = vmatprep.mubr.f32.mxu0 0.0
      %461 = vmatmul.mubr.f32.gmra.mrb[0].mxu0 %v394
      %v462 = vpop.f32.mrb[0].mxu0
      %v463 = vadd.f32 %v391, %v462
      %v464 = vpop.f32.mrb[0].mxu0
      %465 = vdwg.mxu0
      %466 = vst [vmem:[%s273] sm:$0xf] %v463
      %p467 = scmp.lt.s32.totalorder %s18, 1
      %s468 = scalar_select %p467, %s18, 1
      %s469 = smul.addr %s468, 4
      %s470 = scalar_lea.vmem %s7, %s469
      // Predicated region
      $region49: #{blob_model_forward.1} parent=47 // pred_check
        %p471 = pneg %p188
      $region50: #{blob_model_forward.1} parent=47 // pred_check_branch
        %473 = sbr.rel (%p471) target = $region52
      $region51: #{blob_model_forward.1} parent=47 // pred_region
        _
      $region52: #{blob_model_forward.1} parent=47 // pred_fallthru
        _
    $region48: #{blob_model_forward.1} parent=5 // pred_fallthru
      _
    %p474 = scmp.le.s32.totalorder 2, %s13
    // Predicated region
    $region53: #{blob_model_forward.1} parent=5 // pred_check
      %p475 = pneg %p474
    $region54: #{blob_model_forward.1} parent=5 // pred_check_branch
      %477 = sbr.rel (%p475) target = $region56
    $region55: #{blob_model_forward.1} parent=5 // pred_region
      %s478 = ssub.s32 %s13, 2
      // Predicated region
      $region57: #{blob_model_forward.1} parent=55 // pred_check
        %p479 = pneg %p194
      $region58: #{blob_model_forward.1} parent=55 // pred_check_branch
        %481 = sbr.rel (%p479) target = $region60
      $region59: #{blob_model_forward.1} parent=55 // pred_region
        %p482 = scmp.lt.s32.totalorder %s19, 1
        %s483 = scalar_select %p482, %s19, 1
        %s484 = smul.addr %s483, 4
        %s485 = scalar_lea.vmem %s7, %s484
      $region60: #{blob_model_forward.1} parent=55 // pred_fallthru
        _
    $region56: #{blob_model_forward.1} parent=5 // pred_fallthru
      _
  $region6: #{blob_model_forward.1} parent=0 // loop_footer
    %s17 = sadd.s32 1, %s13
  $region7: #{blob_model_forward.1} parent=0 // loop_footer_branch
    %12 = sbr.rel target = $region3
  $region8: #{blob_model_forward.1} parent=0 // loop_exit
    _

</llo_original>
